<compile_context>
chip_gen: v7x
topology: tpu7x:2x2x1
jax: 0.10.0
libtpu: 0.0.40
codegen_flags: <defaults>
</compile_context>

<pallas_src>
import functools

import jax
import jax.numpy as jnp
from jax.experimental import pallas as pl
from jax.experimental.pallas import tpu as pltpu


def _ceil_to(x: int, m: int) -> int:
    return ((x + m - 1) // m) * m


def _vmem_capacity_bytes() -> int:
    try:
        return int(pltpu.get_tpu_info().vmem_capacity_bytes)
    except Exception:
        return 64 * 1024 * 1024           # conservative fallback (v7x per-core VMEM)


def _vmem_limit(est_bytes: int, cap: int) -> int:
    want = max(32 * 1024 * 1024, int(1.5 * est_bytes))
    return int(min(want, int(cap * 0.85)))


# ---------------------------------------------------------------------------
# Stage 1:  h1 = relu(layernorm(x)) @ W        (bias added in stage 2)
# ---------------------------------------------------------------------------
def _stage1_kernel(x_ref, w_ref, gamma_ref, beta_ref, h1_ref, *,
                   true_f, eps, mm_dtype, needs_mask):
    x = x_ref[...].astype(jnp.float32)                 # (tm1, F_pad); padded lanes are 0
    inv_f = 1.0 / float(true_f)

    # LayerNorm over the true feature lanes (torch semantics: biased var, eps in rsqrt).
    mean = jnp.sum(x, axis=-1, keepdims=True) * inv_f  # zero padded lanes don't perturb the sum
    centered = x - mean
    if needs_mask:                                     # only emitted when F < F_pad
        lane = jax.lax.broadcasted_iota(jnp.int32, x.shape, dimension=1)
        centered = jnp.where(lane < true_f, centered, 0.0)
    var = jnp.sum(centered * centered, axis=-1, keepdims=True) * inv_f
    y = centered * jax.lax.rsqrt(var + eps)
    y = y * gamma_ref[...] + beta_ref[...]             # padded gamma/beta lanes are 0

    # Activation (ReLU); Dropout(p=0.0) is identity under eval semantics.
    # TODO(synk): training-mode dropout (p > 0) with RNG masking is not implemented.
    y = jnp.maximum(y, 0.0)

    # relu(LN(x)) @ W on the MXU: low-precision inputs, f32 accumulation.
    h1_ref[...] = jnp.dot(y.astype(mm_dtype), w_ref[...],
                          preferred_element_type=jnp.float32).astype(mm_dtype)


# ---------------------------------------------------------------------------
# Stage 2:  out = x + adj @ h1 + b     (streaming MXU reduction over adj tiles)
# ---------------------------------------------------------------------------
def _stage2_kernel(adj_ref, h1_ref, x_ref, b_ref, o_ref, *scratch,
                   tn, h1_resident, mm_dtype, acc_in_out):
    k = pl.program_id(1)
    acc_ref = o_ref if acc_in_out else scratch[0]

    @pl.when(k == 0)
    def _init():
        # Seed with residual + bias so no separate finalize pass is needed.
        acc_ref[...] = x_ref[...].astype(jnp.float32) + b_ref[...]

    if h1_resident:
        # h1 lives in VMEM for the whole grid; slice the k-th row block.
        h1_tile = h1_ref[pl.ds(pl.multiple_of(k * tn, tn), tn), :]
    else:
        h1_tile = h1_ref[...]

    # adj tile is DMA'd in its original dtype (no wrapper pad+cast pass); cast on VPU.
    acc_ref[...] += jnp.dot(adj_ref[...].astype(mm_dtype), h1_tile,
                            preferred_element_type=jnp.float32)

    if not acc_in_out:
        @pl.when(k == pl.num_programs(1) - 1)
        def _finalize():
            o_ref[...] = acc_ref[...].astype(o_ref.dtype)


def residual_block(x, adj, w, b, gamma, beta, *,
                   node_tile=1024, matmul_dtype=jnp.bfloat16, eps=1e-5):
    """out = x + adj @ (relu(layernorm(x)) @ W) + b   (ResidualBlock.forward, eval mode).

    matmul_dtype sets the MXU input precision (bf16 default; pass jnp.float32 for a
    full-precision adjacency path at ~2x HBM bytes in stage 2).
    """
    N, F = x.shape
    assert adj.shape == (N, N)
    f32 = jnp.float32
    mm_bytes = jnp.dtype(matmul_dtype).itemsize
    adj_bytes = jnp.dtype(adj.dtype).itemsize
    out_dtype = x.dtype
    out_bytes = jnp.dtype(out_dtype).itemsize
    cap = _vmem_capacity_bytes()

    # Lane-dense feature dim; one node tile for stage-1 rows and stage-2 rows/k so that
    # padding costs at most one partial tile per axis and adj can pass through un-copied
    # when N is already aligned.
    F_pad = max(128, _ceil_to(F, 128))
    tn = min(node_tile, _ceil_to(N, 8))
    N_pad = _ceil_to(N, tn)
    needs_mask = (F != F_pad)

    # ---- wrapper-side padding (fast paths: zero copies for aligned inputs) ----
    if N == N_pad and F == F_pad and x.dtype == f32:
        x_p = x
    else:
        x_p = jnp.zeros((N_pad, F_pad), f32).at[:N, :F].set(x.astype(f32))

    if N == N_pad:
        adj_p = adj                      # no pad, no cast: adj read once from HBM as-is
    else:
        adj_p = jnp.zeros((N_pad, N_pad), adj.dtype).at[:N, :N].set(adj)

    if F == F_pad and w.dtype == matmul_dtype:
        w_p = w
    else:
        w_p = jnp.zeros((F_pad, F_pad), matmul_dtype).at[:F, :F].set(w.astype(matmul_dtype))

    b_p = jnp.zeros((1, F_pad), f32).at[:, :F].set(jnp.reshape(b, (1, F)).astype(f32))
    g_p = jnp.zeros((1, F_pad), f32).at[:, :F].set(jnp.reshape(gamma, (1, F)).astype(f32))
    be_p = jnp.zeros((1, F_pad), f32).at[:, :F].set(jnp.reshape(beta, (1, F)).astype(f32))

    # ------------------- Stage 1: h1 = relu(LN(x)) @ W -------------------
    # Resident W unless it would blow a v7x-sized VMEM budget; then tile W's output
    # columns (256-aligned widths for the 256-wide v6e/v7x MXU) and keep x resident.
    if F_pad * F_pad * mm_bytes <= min(16 * 1024 * 1024, cap // 4):
        tf = F_pad
    else:
        tf = next(t for t in (2048, 1024, 512, 256, 128) if F_pad % t == 0)

    tm1 = tn
    if tn == node_tile:
        # Wide-feature guard: keep x / h1 tile buffers modest (power-of-two halving
        # keeps tm1 a divisor of N_pad).
        while tm1 > 256 and (2 * tm1 * F_pad * 4 + 2 * tm1 * tf * mm_bytes) > cap // 3:
            tm1 //= 2

    s1_vmem = (2 * tm1 * F_pad * 4            # x tiles (double-buffered)
               + 2 * F_pad * tf * mm_bytes    # W tiles
               + 4 * F_pad * 4                # gamma/beta
               + 2 * tm1 * tf * mm_bytes)     # h1 output tiles
    h1 = pl.pallas_call(
        functools.partial(_stage1_kernel, true_f=F, eps=eps,
                          mm_dtype=matmul_dtype, needs_mask=needs_mask),
        out_shape=jax.ShapeDtypeStruct((N_pad, F_pad), matmul_dtype),
        grid_spec=pltpu.PrefetchScalarGridSpec(
            num_scalar_prefetch=0,
            grid=(N_pad // tm1, F_pad // tf),
            in_specs=[
                pl.BlockSpec((tm1, F_pad), lambda i, j: (i, 0)),   # x rows (resident over j)
                pl.BlockSpec((F_pad, tf), lambda i, j: (0, j)),    # W (resident when tf==F_pad)
                pl.BlockSpec((1, F_pad), lambda i, j: (0, 0)),     # gamma resident
                pl.BlockSpec((1, F_pad), lambda i, j: (0, 0)),     # beta resident
            ],
            out_specs=pl.BlockSpec((tm1, tf), lambda i, j: (i, j)),
        ),
        compiler_params=pltpu.CompilerParams(
            dimension_semantics=("parallel", "parallel"),
            vmem_limit_bytes=_vmem_limit(s1_vmem, cap),
        ),
        cost_estimate=pl.CostEstimate(
            flops=int(2 * N_pad * F_pad * F_pad + 10 * N_pad * F_pad),
            transcendentals=int(N_pad),
            bytes_accessed=int(N_pad * F_pad * 4 + F_pad * F_pad * mm_bytes
                               + N_pad * F_pad * mm_bytes),
        ),
    )(x_p, w_p, g_p, be_p)

    # ------------------- Stage 2: out = x + adj @ h1 + b -------------------
    acc_in_out = (out_dtype == f32)          # accumulate straight into the resident output

    fixed_vmem = (2 * tn * tn * adj_bytes    # adj tiles (double-buffered, original dtype)
                  + 2 * tn * F_pad * 4       # residual x tiles
                  + 2 * F_pad * 4            # bias
                  + 2 * tn * F_pad * out_bytes
                  + (0 if acc_in_out else tn * F_pad * 4))
    h1_resident = (fixed_vmem + 2 * N_pad * F_pad * mm_bytes) <= int(0.7 * cap)
    if h1_resident:
        h1_spec = pl.BlockSpec((N_pad, F_pad), lambda i, k: (0, 0))   # DMA'd once, resident
        s2_vmem = fixed_vmem + 2 * N_pad * F_pad * mm_bytes
    else:
        h1_spec = pl.BlockSpec((tn, F_pad), lambda i, k: (k, 0))
        s2_vmem = fixed_vmem + 2 * tn * F_pad * mm_bytes

    out_p = pl.pallas_call(
        functools.partial(_stage2_kernel, tn=tn, h1_resident=h1_resident,
                          mm_dtype=matmul_dtype, acc_in_out=acc_in_out),
        out_shape=jax.ShapeDtypeStruct((N_pad, F_pad), out_dtype),
        grid_spec=pltpu.PrefetchScalarGridSpec(
            num_scalar_prefetch=0,
            grid=(N_pad // tn, N_pad // tn),   # (row blocks: parallel, k blocks: reduction, last)
            in_specs=[
                pl.BlockSpec((tn, tn), lambda i, k: (i, k)),      # adj tile
                h1_spec,                                          # h1 (VMEM-resident when it fits)
                pl.BlockSpec((tn, F_pad), lambda i, k: (i, 0)),   # residual x (resident over k)
                pl.BlockSpec((1, F_pad), lambda i, k: (0, 0)),    # bias resident
            ],
            out_specs=pl.BlockSpec((tn, F_pad), lambda i, k: (i, 0)),
            scratch_shapes=([] if acc_in_out
                            else [pltpu.VMEM((tn, F_pad), jnp.float32)]),
        ),
        compiler_params=pltpu.CompilerParams(
            dimension_semantics=("parallel", "arbitrary"),
            vmem_limit_bytes=_vmem_limit(s2_vmem, cap),
        ),
        cost_estimate=pl.CostEstimate(
            flops=int(2 * N_pad * N_pad * F_pad),
            transcendentals=0,
            bytes_accessed=int(N_pad * N_pad * adj_bytes
                               + N_pad * F_pad * (mm_bytes + 4 + out_bytes)),
        ),
    )(adj_p, h1, x_p, b_p)

    if N == N_pad and F == F_pad:
        return out_p
    return out_p[:N, :F]


# ---------------------------------------------------------------------------
# Pure-JAX references
# ---------------------------------------------------------------------------
def _reference_f32(x, adj, w, b, gamma, beta):
    xf = x.astype(jnp.float32)
    mean = jnp.mean(xf, axis=-1, keepdims=True)
    var = jnp.mean((xf - mean) ** 2, axis=-1, keepdims=True)
    y = (xf - mean) * jax.lax.rsqrt(var + 1e-5) * gamma + beta
    y = jnp.maximum(y, 0.0)
    h = adj.astype(jnp.float32) @ (y @ w.astype(jnp.float32)) + b
    return (xf + h).astype(x.dtype)


def _reference_matched(x, adj, w, b, gamma, beta, mm_dtype):
    # Same math, with the kernel's bf16 matmul-input / f32-accumulate casts.
    xf = x.astype(jnp.float32)
    mean = jnp.mean(xf, axis=-1, keepdims=True)
    var = jnp.mean((xf - mean) ** 2, axis=-1, keepdims=True)
    y = (xf - mean) * jax.lax.rsqrt(var + 1e-5) * gamma + beta
    y = jnp.maximum(y, 0.0)
    h1 = jnp.dot(y.astype(mm_dtype), w.astype(mm_dtype),
                 preferred_element_type=jnp.float32).astype(mm_dtype)
    h = jnp.dot(adj.astype(mm_dtype), h1, preferred_element_type=jnp.float32) + b
    return (xf + h).astype(x.dtype)


def _make_inputs(key, n, f):
    k_x, k_adj, k_w, k_b, k_g = jax.random.split(key, 5)
    x = jax.random.normal(k_x, (n, f), dtype=jnp.float32)
    a = (jax.random.uniform(k_adj, (n, n)) > 0.7).astype(jnp.float32)
    a = jnp.maximum(a, a.T) + jnp.eye(n, dtype=jnp.float32)
    adj = a / jnp.sum(a, axis=-1, keepdims=True)           # row-normalized, self-loops
    w = jax.random.normal(k_w, (f, f), dtype=jnp.float32) * (1.0 / jnp.sqrt(f))
    b = jax.random.normal(k_b, (1, f), dtype=jnp.float32) * 0.01
    gamma = 1.0 + 0.1 * jax.random.normal(k_g, (1, f), dtype=jnp.float32)
    beta = jnp.zeros((1, f), dtype=jnp.float32)
    return x, adj, w, b, gamma, beta


def _run_case(key, n, f, node_tile):
    x, adj, w, b, gamma, beta = _make_inputs(key, n, f)
    out = residual_block(x, adj, w, b, gamma, beta, node_tile=node_tile)
    out = jax.block_until_ready(out)
    assert out.shape == (n, f)

    ref_match = _reference_matched(x, adj, w, b, gamma, beta, jnp.bfloat16)
    ref_exact = _reference_f32(x, adj, w, b, gamma, beta)
    assert jnp.allclose(out, ref_match, atol=1e-2, rtol=1e-2), "mismatch vs matched reference"
    assert jnp.allclose(out, ref_exact, atol=5e-2, rtol=5e-2), "mismatch vs f32 reference"


if __name__ == "__main__":
    key = jax.random.PRNGKey(0)
    k1, k2, k3, k4 = jax.random.split(key, 4)

    # Single-tile case (block == full array exemption path).
    _run_case(k1, n=16, f=32, node_tile=1024)

    # Multi-tile grid: accumulate-over-k reduction with adj pass-through (aligned N).
    _run_case(k2, n=256, f=32, node_tile=128)

    # Ragged N: one partial tile of zero padding (adj / x padded in the wrapper).
    _run_case(k3, n=200, f=32, node_tile=128)

    # Fully aligned N and F: no lane mask, no pad copies, no output slice.
    _run_case(k4, n=128, f=128, node_tile=128)

    print("KERNEL_OK")
</pallas_src>

<mosaic_0001>
module attributes {stable_mosaic.version = 11 : i64} {
  func.func @_stage1_kernel(%arg0: i32, %arg1: i32, %arg2: memref<16x128xf32, #tpu.memory_space<vmem>>, %arg3: memref<128x128xbf16, #tpu.memory_space<vmem>>, %arg4: memref<1x128xf32, #tpu.memory_space<vmem>>, %arg5: memref<1x128xf32, #tpu.memory_space<vmem>>, %arg6: memref<16x128xbf16, #tpu.memory_space<vmem>>) attributes {dimension_semantics = [#tpu.dimension_semantics<parallel>, #tpu.dimension_semantics<parallel>], iteration_bounds = array<i64: 1, 1>, scalar_prefetch = 0 : i64, scratch_operands = 0 : i64, tpu.core_type = #tpu.core_type<tc>, window_params = [{transform_indices = @transform_0, window_bounds = array<i64: 16, 128>}, {transform_indices = @transform_1, window_bounds = array<i64: 128, 128>}, {pipeline_mode = #tpu.pipeline_mode<synchronous>, transform_indices = @transform_2, window_bounds = array<i64: 1, 128>}, {pipeline_mode = #tpu.pipeline_mode<synchronous>, transform_indices = @transform_3, window_bounds = array<i64: 1, 128>}, {transform_indices = @transform_4, window_bounds = array<i64: 16, 128>}]} {
    %c0 = arith.constant 0 : index
    %c0_0 = arith.constant 0 : index
    %0 = vector.load %arg2[%c0, %c0_0] : memref<16x128xf32, #tpu.memory_space<vmem>>, vector<16x128xf32>
    %cst = arith.constant dense<0.000000e+00> : vector<16xf32>
    %1 = vector.multi_reduction <add>, %0, %cst [1] : vector<16x128xf32> to vector<16xf32>
    %2 = vector.shape_cast %1 : vector<16xf32> to vector<16x1xf32>
    %cst_1 = arith.constant 3.125000e-02 : f32
    %3 = vector.broadcast %cst_1 : f32 to vector<16x1xf32>
    %4 = arith.mulf %2, %3 : vector<16x1xf32>
    %5 = vector.broadcast %4 : vector<16x1xf32> to vector<16x128xf32>
    %6 = arith.subf %0, %5 : vector<16x128xf32>
    %7 = tpu.iota {dimensions = array<i32: 1>} : vector<16x128xi32>
    %c32_i32 = arith.constant 32 : i32
    %8 = vector.broadcast %c32_i32 : i32 to vector<16x128xi32>
    %9 = arith.cmpi slt, %7, %8 : vector<16x128xi32>
    %cst_2 = arith.constant 0.000000e+00 : f32
    %10 = vector.broadcast %cst_2 : f32 to vector<16x128xf32>
    %11 = arith.select %9, %6, %10 : vector<16x128xi1>, vector<16x128xf32>
    %12 = arith.mulf %11, %11 : vector<16x128xf32>
    %cst_3 = arith.constant dense<0.000000e+00> : vector<16xf32>
    %13 = vector.multi_reduction <add>, %12, %cst_3 [1] : vector<16x128xf32> to vector<16xf32>
    %14 = vector.shape_cast %13 : vector<16xf32> to vector<16x1xf32>
    %cst_4 = arith.constant 3.125000e-02 : f32
    %15 = vector.broadcast %cst_4 : f32 to vector<16x1xf32>
    %16 = arith.mulf %14, %15 : vector<16x1xf32>
    %cst_5 = arith.constant 9.99999974E-6 : f32
    %17 = vector.broadcast %cst_5 : f32 to vector<16x1xf32>
    %18 = arith.addf %16, %17 : vector<16x1xf32>
    %19 = math.rsqrt %18 : vector<16x1xf32>
    %20 = vector.broadcast %19 : vector<16x1xf32> to vector<16x128xf32>
    %21 = arith.mulf %11, %20 : vector<16x128xf32>
    %c0_6 = arith.constant 0 : index
    %c0_7 = arith.constant 0 : index
    %22 = vector.load %arg4[%c0_6, %c0_7] : memref<1x128xf32, #tpu.memory_space<vmem>>, vector<1x128xf32>
    %23 = vector.broadcast %22 : vector<1x128xf32> to vector<16x128xf32>
    %24 = arith.mulf %21, %23 : vector<16x128xf32>
    %c0_8 = arith.constant 0 : index
    %c0_9 = arith.constant 0 : index
    %25 = vector.load %arg5[%c0_8, %c0_9] : memref<1x128xf32, #tpu.memory_space<vmem>>, vector<1x128xf32>
    %26 = vector.broadcast %25 : vector<1x128xf32> to vector<16x128xf32>
    %27 = arith.addf %24, %26 : vector<16x128xf32>
    %cst_10 = arith.constant 0.000000e+00 : f32
    %28 = vector.broadcast %cst_10 : f32 to vector<16x128xf32>
    %29 = arith.maximumf %27, %28 : vector<16x128xf32>
    %30 = arith.truncf %29 : vector<16x128xf32> to vector<16x128xbf16>
    %c0_11 = arith.constant 0 : index
    %c0_12 = arith.constant 0 : index
    %31 = vector.load %arg3[%c0_11, %c0_12] : memref<128x128xbf16, #tpu.memory_space<vmem>>, vector<128x128xbf16>
    %cst_13 = arith.constant dense<0.000000e+00> : vector<16x128xf32>
    %32 = tpu.matmul %30, %31, %cst_13 {dimension_numbers = #tpu.dot_dimension_numbers<[1], [0], [0], [1], [0, 0, 1, 1], [], []>} : vector<16x128xbf16>, vector<128x128xbf16>, vector<16x128xf32> -> vector<16x128xf32>
    %33 = arith.truncf %32 : vector<16x128xf32> to vector<16x128xbf16>
    %c0_14 = arith.constant 0 : index
    %c0_15 = arith.constant 0 : index
    %34 = vector.load %arg6[%c0_14, %c0_15] : memref<16x128xbf16, #tpu.memory_space<vmem>>, vector<16x128xbf16>
    tpu.vector_store %arg6[%c0_14, %c0_15], %33 {strides = array<i32>} : memref<16x128xbf16, #tpu.memory_space<vmem>>, vector<16x128xbf16>,
    return
  }
  func.func @transform_0(%arg0: i32, %arg1: i32) -> (i32, i32) {
    %c0_i32 = arith.constant 0 : i32
    %c0_i32_0 = arith.constant 0 : i32
    return %arg0, %c0_i32 : i32, i32
  }
  func.func @transform_1(%arg0: i32, %arg1: i32) -> (i32, i32) {
    %c0_i32 = arith.constant 0 : i32
    %c0_i32_0 = arith.constant 0 : i32
    return %c0_i32, %arg1 : i32, i32
  }
  func.func @transform_2(%arg0: i32, %arg1: i32) -> (i32, i32) {
    %c0_i32 = arith.constant 0 : i32
    %c0_i32_0 = arith.constant 0 : i32
    %c0_i32_1 = arith.constant 0 : i32
    return %c0_i32, %c0_i32_0 : i32, i32
  }
  func.func @transform_3(%arg0: i32, %arg1: i32) -> (i32, i32) {
    %c0_i32 = arith.constant 0 : i32
    %c0_i32_0 = arith.constant 0 : i32
    %c0_i32_1 = arith.constant 0 : i32
    return %c0_i32, %c0_i32_0 : i32, i32
  }
  func.func @transform_4(%arg0: i32, %arg1: i32) -> (i32, i32) {
    %c0_i32 = arith.constant 0 : i32
    return %arg0, %arg1 : i32, i32
  }
}

</mosaic_0001>

<llo_original>
// kernel: tpu_custom_call.1
$region0: #{tpu_custom_call.1}
  #allocation0 [shape = 'u32[]', space=smem, size = 0x4, offset = 0x4, fixed_abs, tag = 'smem constant byte address 0x4 - core index']
  #allocation1 [shape = 'u32[144,128]{1,0:T(1,128)}', space=vmem, size = 0x12000, scoped, tag = 'internal scratch']
  %s0 = inlined_call_operand.hbm [shape: f32[16,128], index: 0, kind: input, shape index: {}]
  %s1 = inlined_call_operand.hbm [shape: bf16[128,128], index: 1, kind: input, shape index: {}]
  %s2 = inlined_call_operand.vmem [shape: f32[1,128], index: 2, kind: input, shape index: {}]
  %s3 = inlined_call_operand.vmem [shape: f32[1,128], index: 3, kind: input, shape index: {}]
  %s4 = inlined_call_operand.hbm [shape: bf16[16,128], index: 4, kind: output, shape index: {}]
  %s5 = sld [smem:[#allocation0]]
  $region34: #{tpu_custom_call.1} parent=0
    _
  %s7 = ssub.s32 1, %s5
  %s8 = scalar_select 0, %s7, %s5
  $region1: #{tpu_custom_call.1} parent=0
    #allocation2 [shape = 'u8[8192]{0}', space=vmem, size = 0x2000, scoped, tag = 'input window, operand 0, single buffered']
    #allocation3 [shape = 's32[1]{0}', space=sflag, size = 0x4, scoped, tag = 'scoped memory for tpu_custom_call.1']
    #allocation4 [shape = 's32[1]{0}', space=sflag, size = 0x4, scoped, tag = 'scoped memory for tpu_custom_call.1']
    #allocation5 [shape = 'u8[32768]{0}', space=vmem, size = 0x8000, scoped, tag = 'input window, operand 1, single buffered']
    #allocation6 [shape = 's32[1]{0}', space=sflag, size = 0x4, scoped, tag = 'scoped memory for tpu_custom_call.1']
    #allocation7 [shape = 'u8[4096]{0}', space=vmem, size = 0x1000, scoped, tag = 'output window, operand 0, single buffered']
    %9 = vsyncpa [#allocation3], 0
    %10 = vsyncpa [#allocation6], 0
    %11 = vsyncpa [#allocation4], 0
    // Predicated region
    $region2: #{tpu_custom_call.1} parent=1 // pred_check
      _
    $region3: #{tpu_custom_call.1} parent=1 // pred_check_branch
      %13 = sbr.rel (0) target = $region5
    $region4: #{tpu_custom_call.1} parent=1 // pred_region
      %s15 = ssub.s32 256, 256
      %16 = vsyncadd [#allocation3], %s15
      %s17 = sshll.u32 [#allocation2], 4
      %s18 = int_to_ptr.vmem [resolvable:$true] %s17
      %23 = dma.hbm_to_vmem [thread:$0]  %s0, 256, %s18, [#allocation3], 128, 128, 8
    $region5: #{tpu_custom_call.1} parent=1 // pred_fallthru
      _
    // Predicated region
    $region6: #{tpu_custom_call.1} parent=1 // pred_check
      _
    $region7: #{tpu_custom_call.1} parent=1 // pred_check_branch
      %25 = sbr.rel (0) target = $region9
    $region8: #{tpu_custom_call.1} parent=1 // pred_region
      %s27 = ssub.s32 1024, 1024
      %28 = vsyncadd [#allocation6], %s27
      %s29 = sshll.u32 [#allocation5], 4
      %s30 = int_to_ptr.vmem [resolvable:$true] %s29
      %35 = dma.hbm_to_vmem [thread:$0]  %s1, 1024, %s30, [#allocation6], 64, 64, 4
    $region9: #{tpu_custom_call.1} parent=1 // pred_fallthru
      _
    // Predicated region
    $region10: #{tpu_custom_call.1} parent=1 // pred_check
      _
    $region11: #{tpu_custom_call.1} parent=1 // pred_check_branch
      %37 = sbr.rel (0) target = $region13
    $region12: #{tpu_custom_call.1} parent=1 // pred_region
      _
    $region13: #{tpu_custom_call.1} parent=1 // pred_fallthru
      _
    // Predicated region
    $region14: #{tpu_custom_call.1} parent=1 // pred_check
      _
    $region15: #{tpu_custom_call.1} parent=1 // pred_check_branch
      %39 = sbr.rel (0) target = $region17
    $region16: #{tpu_custom_call.1} parent=1 // pred_region
      _
    $region17: #{tpu_custom_call.1} parent=1 // pred_fallthru
      _
    // Predicated region
    $region18: #{tpu_custom_call.1} parent=1 // pred_check
      _
    $region19: #{tpu_custom_call.1} parent=1 // pred_check_branch
      %41 = sbr.rel (0) target = $region21
    $region20: #{tpu_custom_call.1} parent=1 // pred_region
      %42 = dma.done [#allocation3], 256
    $region21: #{tpu_custom_call.1} parent=1 // pred_fallthru
      _
    // Predicated region
    $region22: #{tpu_custom_call.1} parent=1 // pred_check
      _
    $region23: #{tpu_custom_call.1} parent=1 // pred_check_branch
      %44 = sbr.rel (0) target = $region25
    $region24: #{tpu_custom_call.1} parent=1 // pred_region
      %45 = dma.done [#allocation6], 1024
    $region25: #{tpu_custom_call.1} parent=1 // pred_fallthru
      _
    %v47 = vld [vmem:[#allocation2] sm:$0xff]
    %v48 = vld [vmem:[#allocation2 + $0x8] sm:$0xff]
    %49 = vadd.xlane.f32.xlu0 %v47
    %v50 = vpop.xlane.xlu0 %49
    %51 = vadd.xlane.f32.xlu0 %v48
    %v52 = vpop.xlane.xlu0 %51
    %v53 = vmul.f32 %v50, 0.03125
    %v54 = vmul.f32 %v52, 0.03125
    %v55 = vsub.f32 %v47, %v53
    %v56 = vsub.f32 %v48, %v54
    %v57 = vlaneseq
    %v58 = vand.u32 %v57, 127
    %vm59 = vcmp.lt.s32.totalorder %v58, 32
    %v60 = vsel %vm59, %v55, 0.0
    %v61 = vsel %vm59, %v56, 0.0
    %v62 = vmul.f32 %v60, %v60
    %v63 = vmul.f32 %v61, %v61
    %64 = vadd.xlane.f32.xlu0 %v62
    %v65 = vpop.xlane.xlu0 %64
    %66 = vadd.xlane.f32.xlu0 %v63
    %v67 = vpop.xlane.xlu0 %66
    %v68 = vmul.f32 %v65, 0.03125
    %v69 = vmul.f32 %v67, 0.03125
    %v70 = vadd.f32 %v68, 1e-05
    %v71 = vadd.f32 %v69, 1e-05
    %v72 = vrsqrt.pop %v70
    %v73 = vrsqrt.pop %v71
    %v74 = vmul.f32 %v60, %v72
    %v75 = vmul.f32 %v61, %v73
    %v76 = vld [vmem:[%s2] sm:$0x1]
    %v78 = vlaneseq
    %v79 = vshrl.u32 %v78, 7
    %v80 = vsub.s32 0, %v79
    %v81 = vrot.slane %v76, %v80
    %v83 = vmul.f32 %v74, %v81
    %v84 = vmul.f32 %v75, %v81
    %v85 = vld [vmem:[%s3] sm:$0x1]
    %v87 = vlaneseq
    %v88 = vshrl.u32 %v87, 7
    %v89 = vsub.s32 0, %v88
    %v90 = vrot.slane %v85, %v89
    %v92 = vadd.f32 %v83, %v90
    %v93 = vadd.f32 %v84, %v90
    %v94 = vmax.f32 %v92, 0.0
    %v95 = vmax.f32 %v93, 0.0
    %v96 = vpack.c.bf16 %v95, %v94
    %v97 = vld [vmem:[#allocation5] sm:$0xf]
    %v98 = vld [vmem:[#allocation5 + $0x4] sm:$0xf]
    %v99 = vld [vmem:[#allocation5 + $0x8] sm:$0xf]
    %v100 = vld [vmem:[#allocation5 + $0xc] sm:$0xf]
    %v101 = vld [vmem:[#allocation5 + $0x10] sm:$0xf]
    %v102 = vld [vmem:[#allocation5 + $0x14] sm:$0xf]
    %v103 = vld [vmem:[#allocation5 + $0x18] sm:$0xf]
    %v104 = vld [vmem:[#allocation5 + $0x1c] sm:$0xf]
    %v105 = vld [vmem:[#allocation5 + $0x20] sm:$0xf]
    %v106 = vld [vmem:[#allocation5 + $0x24] sm:$0xf]
    %v107 = vld [vmem:[#allocation5 + $0x28] sm:$0xf]
    %v108 = vld [vmem:[#allocation5 + $0x2c] sm:$0xf]
    %v109 = vld [vmem:[#allocation5 + $0x30] sm:$0xf]
    %v110 = vld [vmem:[#allocation5 + $0x34] sm:$0xf]
    %v111 = vld [vmem:[#allocation5 + $0x38] sm:$0xf]
    %v112 = vld [vmem:[#allocation5 + $0x3c] sm:$0xf]
    %v129 = vunpack.c.l.b16 %v97
    %v130 = vunpack.c.l.b16 %v98
    %v131 = vunpack.c.l.b16 %v99
    %v132 = vunpack.c.l.b16 %v100
    %v133 = vunpack.c.l.b16 %v101
    %v134 = vunpack.c.l.b16 %v102
    %v135 = vunpack.c.l.b16 %v103
    %v136 = vunpack.c.l.b16 %v104
    %v137 = vunpack.c.l.b16 %v105
    %v138 = vunpack.c.l.b16 %v106
    %v139 = vunpack.c.l.b16 %v107
    %v140 = vunpack.c.l.b16 %v108
    %v141 = vunpack.c.l.b16 %v109
    %v142 = vunpack.c.l.b16 %v110
    %v143 = vunpack.c.l.b16 %v111
    %v144 = vunpack.c.l.b16 %v112
    %v145 = vpack.c.b16 %v130, %v129
    %v146 = vpack.c.b16 %v132, %v131
    %v147 = vpack.c.b16 %v134, %v133
    %v148 = vpack.c.b16 %v136, %v135
    %v149 = vpack.c.b16 %v138, %v137
    %v150 = vpack.c.b16 %v140, %v139
    %v151 = vpack.c.b16 %v142, %v141
    %v152 = vpack.c.b16 %v144, %v143
    %161 = vmatprep.subr.bf16.mxu0 0
    %162 = vmatpush1.bf16.msra.mxu0 %v145
    %163 = vmatprep.subr.bf16.mxu0 0
    %164 = vmatpush1.bf16.msra.mxu0 %v146
    %165 = vmatprep.subr.bf16.mxu0 0
    %166 = vmatpush1.bf16.msra.mxu0 %v147
    %167 = vmatprep.subr.bf16.mxu0 0
    %168 = vmatpush1.bf16.msra.mxu0 %v148
    %169 = vmatprep.subr.bf16.mxu0 0
    %170 = vmatpush1.bf16.msra.mxu0 %v149
    %171 = vmatprep.subr.bf16.mxu0 0
    %172 = vmatpush1.bf16.msra.mxu0 %v150
    %173 = vmatprep.subr.bf16.mxu0 0
    %174 = vmatpush1.bf16.msra.mxu0 %v151
    %175 = vmatprep.subr.bf16.mxu0 0
    %176 = vmatpush1.bf16.msra.mxu0 %v152
    %177 = vmatprep.subr.bf16.mxu0 0
    %178 = vmatpush1.bf16.msra.mxu0 0
    %179 = vmatprep.subr.bf16.mxu0 0
    %180 = vmatpush1.bf16.msra.mxu0 0
    %181 = vmatprep.subr.bf16.mxu0 0
    %182 = vmatpush1.bf16.msra.mxu0 0
    %183 = vmatprep.subr.bf16.mxu0 0
    %184 = vmatpush1.bf16.msra.mxu0 0
    %185 = vmatprep.subr.bf16.mxu0 0
    %186 = vmatpush1.bf16.msra.mxu0 0
    %187 = vmatprep.subr.bf16.mxu0 0
    %188 = vmatpush1.bf16.msra.mxu0 0
    %189 = vmatprep.subr.bf16.mxu0 0
    %190 = vmatpush1.bf16.msra.mxu0 0
    %191 = vmatprep.subr.bf16.mxu0 0
    %192 = vmatpush1.bf16.msra.mxu0 0
    %193 = vmatprep.mubr.bf16.mxu0 0
    %194 = vmatmul.mubr.bf16.gmra.mrb[0].mxu0 %v96
    %v195 = vpop.f32.mrb[0].mxu0
    %v196 = vadd.f32 0.0, %v195
    %v197 = vpop.f32.mrb[0].mxu0
    %v198 = vpop.f32.mrb[0].mxu0
    %v199 = vadd.f32 0.0, %v198
    %v200 = vpop.f32.mrb[0].mxu0
    %201 = vdwg.mxu0
    %v202 = vpack.c.bf16 %v199, %v196
    %v204 = vunpack.c.l.b16 %v202
    %v205 = vunpack.c.h.b16 %v202
    %v206 = vpack.c.b16 %v204, %v204
    %v207 = vpack.c.b16 %v205, %v205
    %210 = vst [vmem:[#allocation7] sm:$0xf] %v206
    %211 = vst [vmem:[#allocation7 + $0x4] sm:$0xf] %v207
    // Predicated region
    $region26: #{tpu_custom_call.1} parent=1 // pred_check
      _
    $region27: #{tpu_custom_call.1} parent=1 // pred_check_branch
      %213 = sbr.rel (0) target = $region29
    $region28: #{tpu_custom_call.1} parent=1 // pred_region
      %s215 = ssub.s32 128, 128
      %216 = vsyncadd [#allocation4], %s215
      %s217 = sshll.u32 [#allocation7], 4
      %s218 = int_to_ptr.vmem [resolvable:$true] %s217
      %223 = dma.vmem_to_hbm [thread:$0]  %s218, 128, %s4, [#allocation4], 64, 64, 4
    $region29: #{tpu_custom_call.1} parent=1 // pred_fallthru
      _
    // Predicated region
    $region30: #{tpu_custom_call.1} parent=1 // pred_check
      _
    $region31: #{tpu_custom_call.1} parent=1 // pred_check_branch
      %225 = sbr.rel (0) target = $region33
    $region32: #{tpu_custom_call.1} parent=1 // pred_region
      %226 = dma.done [#allocation4], 128
    $region33: #{tpu_custom_call.1} parent=1 // pred_fallthru
      _
    %227 = vsyncpa [#allocation3], 1
    %228 = vsyncpa [#allocation6], 1
    %229 = vsyncpa [#allocation4], 1

</llo_original>
